<compile_context>
chip_gen: v7x
topology: tpu7x:2x2x1
jax: 0.10.0
libtpu: 0.0.40
codegen_flags: <defaults>
</compile_context>

<pallas_src>
import functools

import jax
import jax.numpy as jnp
import numpy as np
from jax.experimental import pallas as pl
from jax.experimental.pallas import tpu as pltpu

_LANES = 128
# Sublane extent per VMEM operand block: 4096 * 128 * 4B = 2 MiB per block;
# (2 inputs + 1 output) x double-buffering = 12 MiB < 32 MiB scoped limit,
# fits v5e/v6e (128 MiB physical VMEM) and v7x (64 MiB physical VMEM).
_TS_TARGET = 4096
# Use the fused (in-kernel, scalar-prefetch-indexed) row gather once a single
# row's feature block is at least this many bytes; below that per-row grid
# steps / small DMAs dominate and one XLA pre-gather pass is cheaper.
_FUSED_GATHER_MIN_ROW_BYTES = 32 * 1024


def _round_up(x, m):
    return (x + m - 1) // m * m


def _blend_body(lam_ref, x0_ref, x1_ref, o_ref):
    # lam_ref: (P,) f32 in SMEM; x0/x1/o: dense (TS, 128) f32 VMEM tiles.
    lam = lam_ref[pl.program_id(0)]
    o_ref[...] = lam * x0_ref[...] + (1.0 - lam) * x1_ref[...]


def _blend_kernel(lam_ref, x0_ref, x1_ref, o_ref):
    _blend_body(lam_ref, x0_ref, x1_ref, o_ref)


def _blend_kernel_gather(order_ref, lam_ref, x0_ref, x1_ref, o_ref):
    del order_ref  # only consumed by the index_maps
    _blend_body(lam_ref, x0_ref, x1_ref, o_ref)


def _blend_pregathered(x3, lam, P, num_group):
    """x3: (num_group, S, 128) pre-gathered (group-contiguous) image data."""
    _, S, _ = x3.shape
    TS = S if S <= _TS_TARGET else _TS_TARGET          # full extent -> no pad
    n_fb = pl.cdiv(S, TS)                              # masked tail block, no pad
    bytes_per_elem = 4
    cost = pl.CostEstimate(
        flops=3 * P * S * _LANES,
        transcendentals=0,
        bytes_accessed=3 * P * S * _LANES * bytes_per_elem,
    )
    grid_spec = pltpu.PrefetchScalarGridSpec(
        num_scalar_prefetch=0,
        grid=(P, n_fb),
        in_specs=[
            pl.BlockSpec(memory_space=pltpu.MemorySpace.SMEM),            # lam (P,)
            pl.BlockSpec((None, TS, _LANES), lambda p, fb: (p, fb, 0)),   # group p
            pl.BlockSpec((None, TS, _LANES),
                         lambda p, fb: (num_group - 1 - p, fb, 0)),       # mirror group
        ],
        out_specs=pl.BlockSpec((None, TS, _LANES), lambda p, fb: (p, fb, 0)),
    )
    return pl.pallas_call(
        _blend_kernel,
        grid_spec=grid_spec,
        out_shape=jax.ShapeDtypeStruct((P, S, _LANES), x3.dtype),
        compiler_params=pltpu.CompilerParams(
            dimension_semantics=("parallel", "parallel"),
            vmem_limit_bytes=32 * 1024 * 1024,
        ),
        cost_estimate=cost,
    )(lam, x3, x3)


def _blend_fused_gather(x3, lam, order, P, G, num_group):
    """x3: (B, S_row, 128) un-gathered image data; order: (B,) int32 (stable
    argsort of group ids).  The kernel's input DMAs perform the row gather via
    scalar-prefetch-driven index_maps -> no wrapper-side jnp.take pass."""
    _, S_row, _ = x3.shape
    TF = S_row if S_row <= _TS_TARGET else _TS_TARGET   # full extent -> no pad
    n_fb = pl.cdiv(S_row, TF)
    n_rows = P * G
    bytes_per_elem = 4
    cost = pl.CostEstimate(
        flops=3 * n_rows * S_row * _LANES,
        transcendentals=0,
        bytes_accessed=3 * n_rows * S_row * _LANES * bytes_per_elem,
    )
    grid_spec = pltpu.PrefetchScalarGridSpec(
        num_scalar_prefetch=1,                 # `order` lands in SMEM
        grid=(P, G, n_fb),
        in_specs=[
            pl.BlockSpec(memory_space=pltpu.MemorySpace.SMEM),            # lam (P,)
            pl.BlockSpec((None, TF, _LANES),
                         lambda p, r, fb, order_ref:
                         (order_ref[p * G + r], fb, 0)),                  # group p, row r
            pl.BlockSpec((None, TF, _LANES),
                         lambda p, r, fb, order_ref:
                         (order_ref[(num_group - 1 - p) * G + r], fb, 0)),  # mirror
        ],
        out_specs=pl.BlockSpec((None, TF, _LANES),
                               lambda p, r, fb, order_ref: (p * G + r, fb, 0)),
    )
    return pl.pallas_call(
        _blend_kernel_gather,
        grid_spec=grid_spec,
        out_shape=jax.ShapeDtypeStruct((n_rows, S_row, _LANES), x3.dtype),
        compiler_params=pltpu.CompilerParams(
            dimension_semantics=("parallel", "parallel", "arbitrary"),
            vmem_limit_bytes=32 * 1024 * 1024,
        ),
        cost_estimate=cost,
    )(order, lam, x3, x3)


@functools.partial(jax.jit, static_argnames=("num_group",))
def mixup_in_distance(batch_image, batch_target, batch_group, lam, *, num_group):
    """batch_image: (B, C, H, W) f32, batch_target: (B, NC) f32 one-hot,
    batch_group: (B,) int32 (each group must have exactly B//num_group rows),
    lam: (num_group//2,) f32 mixing coefficients (one per pair)."""
    B, C, H, W = batch_image.shape
    NC = batch_target.shape[-1]
    F = C * H * W
    # Mixup of two groups requires equal group sizes; unequal per-group counts
    # would silently mis-pair rows (runtime values are not checkable under jit).
    assert B % num_group == 0, "mixup-in-distance assumes equal-sized groups"
    G = B // num_group            # rows per group
    P = num_group // 2            # number of mixed pairs
    n_rows = P * G

    compute_dtype = jnp.float32   # keep f32 to bit-match the reference numerics
    x_flat = batch_image.reshape(B, F).astype(compute_dtype)
    tgt = batch_target.astype(compute_dtype)
    lam = lam.astype(compute_dtype)

    # Stable argsort by group id -> per-group row indices in original batch
    # order, exactly matching torch.where(batch_group == g)[0].
    order = jnp.argsort(batch_group, stable=True).astype(jnp.int32)

    F_pad = _round_up(F, _LANES)
    if F_pad != F:
        # TODO(synk): one extra HBM pass, only hit when C*H*W % 128 != 0.
        x_flat = jnp.pad(x_flat, ((0, 0), (0, F_pad - F)))
    S_row = F_pad // _LANES                               # sublanes per row

    if S_row * _LANES * 4 >= _FUSED_GATHER_MIN_ROW_BYTES:
        # ---- fused gather path: kernel DMAs gather rows straight from HBM ----
        x3 = x_flat.reshape(B, S_row, _LANES)             # free reshape, no copy
        mixed = _blend_fused_gather(x3, lam, order, P, G, num_group)
        mixed2 = mixed.reshape(n_rows, F_pad)
    else:
        # ---- small-row path: one XLA gather, then dense contiguous tiles -----
        x_sorted = jnp.take(x_flat, order, axis=0)        # (B, F_pad), one pass
        S = G * S_row                                     # sublanes per group
        x3 = x_sorted.reshape(num_group, S, _LANES)
        mixed = _blend_pregathered(x3, lam, P, num_group)
        mixed2 = mixed.reshape(n_rows, F_pad)

    if F_pad != F:
        inputs_mix = mixed2[:, :F].reshape(n_rows, C, H, W)
    else:
        inputs_mix = mixed2.reshape(n_rows, C, H, W)

    # ------------- target blend: tiny (n_rows, NC) -> plain XLA -------------
    # (Intentionally outside the kernel: removes tiny DMAs / masked stores.)
    t_grp = jnp.take(tgt, order, axis=0).reshape(num_group, G, NC)
    t0 = t_grp[:P]                                    # groups 0 .. P-1
    t1 = jnp.flip(t_grp[num_group - P:], axis=0)      # groups num_group-1 .. num_group-P
    lam_b = lam[:, None, None]
    targets_mix = (lam_b * t0 + (1.0 - lam_b) * t1).reshape(n_rows, NC)

    return inputs_mix, targets_mix


def _numpy_reference(bi, bt, bg, lm, num_group):
    P = num_group // 2
    exp_imgs, exp_tgts = [], []
    for p in range(P):
        j = num_group - 1 - p
        i0 = np.where(bg == p)[0]
        i1 = np.where(bg == j)[0]
        exp_imgs.append(lm[p] * bi[i0] + (1.0 - lm[p]) * bi[i1])
        exp_tgts.append(lm[p] * bt[i0] + (1.0 - lm[p]) * bt[i1])
    return np.concatenate(exp_imgs, axis=0), np.concatenate(exp_tgts, axis=0)


def _run_case(key, *, num_group, B, C, H, W, NC):
    k_img, k_tgt, k_grp, k_lam = jax.random.split(key, 4)
    G = B // num_group
    P = num_group // 2

    batch_image = jax.random.normal(k_img, (B, C, H, W), dtype=jnp.float32)
    labels = jax.random.randint(k_tgt, (B,), 0, NC)
    batch_target = jax.nn.one_hot(labels, NC, dtype=jnp.float32)
    # each group appears exactly G times, scattered through the batch
    batch_group = jax.random.permutation(
        k_grp, jnp.tile(jnp.arange(num_group, dtype=jnp.int32), G))
    lam = jax.random.beta(k_lam, 1.0, 1.0, shape=(P,)).astype(jnp.float32)

    inputs_mix, targets_mix = mixup_in_distance(
        batch_image, batch_target, batch_group, lam, num_group=num_group)
    jax.block_until_ready((inputs_mix, targets_mix))

    exp_img, exp_tgt = _numpy_reference(
        np.asarray(batch_image), np.asarray(batch_target),
        np.asarray(batch_group), np.asarray(lam), num_group)
    np.testing.assert_allclose(np.asarray(inputs_mix), exp_img, rtol=1e-6, atol=1e-6)
    np.testing.assert_allclose(np.asarray(targets_mix), exp_tgt, rtol=1e-6, atol=1e-6)


if __name__ == "__main__":
    key = jax.random.PRNGKey(0)
    k1, k2 = jax.random.split(key)
    # Small per-row feature size (4 KiB) -> pre-gathered dense-tile path.
    _run_case(k1, num_group=4, B=16, C=4, H=16, W=16, NC=10)
    # Larger per-row feature size (32 KiB) -> fused scalar-prefetch gather path.
    _run_case(k2, num_group=4, B=8, C=8, H=32, W=32, NC=10)
    print("KERNEL_OK")
</pallas_src>

<mosaic_0001>
module attributes {stable_mosaic.version = 11 : i64} {
  func.func @_blend_kernel(%arg0: i32, %arg1: i32, %arg2: memref<2xf32, #tpu.memory_space<smem>>, %arg3: memref<1x32x128xf32, #tpu.memory_space<vmem>>, %arg4: memref<1x32x128xf32, #tpu.memory_space<vmem>>, %arg5: memref<1x32x128xf32, #tpu.memory_space<vmem>>) attributes {dimension_semantics = [#tpu.dimension_semantics<parallel>, #tpu.dimension_semantics<parallel>], iteration_bounds = array<i64: 2, 1>, scalar_prefetch = 0 : i64, scratch_operands = 0 : i64, tpu.core_type = #tpu.core_type<tc>, window_params = [{transform_indices = @transform_0, window_bounds = array<i64: 2>}, {transform_indices = @transform_1, window_bounds = array<i64: 1, 32, 128>}, {transform_indices = @transform_2, window_bounds = array<i64: 1, 32, 128>}, {transform_indices = @transform_3, window_bounds = array<i64: 1, 32, 128>}]} {
    %0 = arith.index_cast %arg0 : i32 to index
    %1 = memref.load %arg2[%0] : memref<2xf32, #tpu.memory_space<smem>>
    %c0 = arith.constant 0 : index
    %c0_0 = arith.constant 0 : index
    %c0_1 = arith.constant 0 : index
    %2 = vector.load %arg3[%c0, %c0_0, %c0_1] : memref<1x32x128xf32, #tpu.memory_space<vmem>>, vector<1x32x128xf32>
    %3 = vector.shape_cast %2 : vector<1x32x128xf32> to vector<32x128xf32>
    %4 = vector.broadcast %1 : f32 to vector<32x128xf32>
    %5 = arith.mulf %4, %3 : vector<32x128xf32>
    %cst = arith.constant 1.000000e+00 : f32
    %6 = arith.subf %cst, %1 : f32
    %c0_2 = arith.constant 0 : index
    %c0_3 = arith.constant 0 : index
    %c0_4 = arith.constant 0 : index
    %7 = vector.load %arg4[%c0_2, %c0_3, %c0_4] : memref<1x32x128xf32, #tpu.memory_space<vmem>>, vector<1x32x128xf32>
    %8 = vector.shape_cast %7 : vector<1x32x128xf32> to vector<32x128xf32>
    %9 = vector.broadcast %6 : f32 to vector<32x128xf32>
    %10 = arith.mulf %9, %8 : vector<32x128xf32>
    %11 = arith.addf %5, %10 : vector<32x128xf32>
    %c0_5 = arith.constant 0 : index
    %c0_6 = arith.constant 0 : index
    %c0_7 = arith.constant 0 : index
    %12 = vector.load %arg5[%c0_5, %c0_6, %c0_7] : memref<1x32x128xf32, #tpu.memory_space<vmem>>, vector<1x32x128xf32>
    %13 = vector.shape_cast %12 : vector<1x32x128xf32> to vector<32x128xf32>
    %14 = vector.shape_cast %11 : vector<32x128xf32> to vector<1x32x128xf32>
    tpu.vector_store %arg5[%c0_5, %c0_6, %c0_7], %14 {strides = array<i32>} : memref<1x32x128xf32, #tpu.memory_space<vmem>>, vector<1x32x128xf32>,
    return
  }
  func.func @transform_0(%arg0: i32, %arg1: i32) -> i32 {
    %c0_i32 = arith.constant 0 : i32
    %c0_i32_0 = arith.constant 0 : i32
    return %c0_i32 : i32
  }
  func.func @transform_1(%arg0: i32, %arg1: i32) -> (i32, i32, i32) {
    %c0_i32 = arith.constant 0 : i32
    %c0_i32_0 = arith.constant 0 : i32
    return %arg0, %arg1, %c0_i32 : i32, i32, i32
  }
  func.func @transform_2(%arg0: i32, %arg1: i32) -> (i32, i32, i32) {
    %c3_i32 = arith.constant 3 : i32
    %0 = arith.subi %c3_i32, %arg0 : i32
    %c0_i32 = arith.constant 0 : i32
    %c0_i32_0 = arith.constant 0 : i32
    return %0, %arg1, %c0_i32 : i32, i32, i32
  }
  func.func @transform_3(%arg0: i32, %arg1: i32) -> (i32, i32, i32) {
    %c0_i32 = arith.constant 0 : i32
    %c0_i32_0 = arith.constant 0 : i32
    return %arg0, %arg1, %c0_i32 : i32, i32, i32
  }
}

</mosaic_0001>

<llo_original>
// kernel: mixup_in_distance.1
$region0: #{mixup_in_distance.1}
  #allocation0 [shape = 'u32[]', space=smem, size = 0x4, offset = 0x4, fixed_abs, tag = 'smem constant byte address 0x4 - core index']
  #allocation1 [shape = 'u32[144,128]{1,0:T(1,128)}', space=vmem, size = 0x12000, scoped, tag = 'internal scratch']
  %s0 = inlined_call_operand.vmem [shape: f32[2], index: 0, kind: input, shape index: {}]
  %s1 = inlined_call_operand.vmem [shape: f32[4,32,128], index: 1, kind: input, shape index: {}, may-alias: {1,2}]
  %s2 = inlined_call_operand.vmem [shape: f32[4,32,128], index: 2, kind: input, shape index: {}, may-alias: {1,2}]
  %s3 = inlined_call_operand.vmem [shape: f32[2,32,128], index: 3, kind: output, shape index: {}]
  %s4 = sld [smem:[#allocation0]]
  $region49: #{mixup_in_distance.1} parent=0
    _
  %s6 = ssub.s32 1, %s4
  %s7 = scalar_select 0, %s6, %s4
  $region1: #{mixup_in_distance.1} parent=0
    #allocation2 [shape = 'u8[512]{0}', space=smem, size = 0x200, scoped, tag = 'input window, operand 0, single buffered']
    #allocation3 [shape = 's32[2]{0}', space=sflag, size = 0x8, scoped, tag = 'scoped memory for mixup_in_distance.1']
    %8 = vsyncpa [#allocation3], 0
    loop: start=0, step=1, limit=4
    $region2: #{mixup_in_distance.1} parent=1 // loop_pre_header
      _
    $region3: #{mixup_in_distance.1} parent=1 // loop_header
      %s10 = sphi 0, %s14
      %p11 = scmp.ge.s32.totalorder %s10, 4
      %s17 = sphi 0, %s29
      %s18 = sphi 0, %s25
      %s19 = sphi 0, %s17
      %s20 = sphi 0, %s18
      %s21 = sphi 0, %s19
      %s22 = sphi 0, %s20
      %s30 = sphi 0, %s30
      %s32 = sphi 0, %s30
      %s33 = sphi 0, %s32
      %s47 = sphi 0, %s33
      %s55 = sphi 0, %s57
      %s58 = sphi 0, %s55
      %s59 = sphi 0, %s58
      %s75 = sphi 0, %s59
      %s85 = sphi 0, %s87
      %s88 = sphi 0, %s85
      %s89 = sphi 0, %s88
      %s105 = sphi 0, %s89
      %s113 = sphi 0, %s115
      %s116 = sphi 0, %s113
      %s117 = sphi 0, %s116
      %s133 = sphi 0, %s117
    $region4: #{mixup_in_distance.1} parent=1 // loop_header_branch
      %13 = sbr.rel (%p11) target = $region8
    $region5: #{mixup_in_distance.1} parent=1 // loop_body
      %s15 = ssub.s32 %s10, 1
      %s16 = ssub.s32 %s10, 2
      %s23 = sadd.s32 1, %s18
      %p24 = scmp.ge.s32.totalorder %s23, 1
      %s25 = scalar_select %p24, 0, %s23
      %s26 = sadd.s32 1, %s17
      %s27 = scalar_select %p24, %s26, %s17
      %p28 = scmp.ge.s32.totalorder %s27, 2
      %s29 = scalar_select %p28, 0, %s27
      %s31 = sadd.s32 %s30, 1
      %p34 = scmp.eq.s32.totalorder %s10, 1
      %p35 = scmp.ne.s32.totalorder %s30, %s32
      %p36 = scmp.eq.s32.totalorder %s10, 0
      %p37 = por %p35, %p36
      %p38 = scmp.ne.s32.totalorder %s30, %s32
      %p39 = scmp.eq.s32.totalorder %s15, 1
      %p40 = por %p38, %p39
      %p41 = scmp.ne.s32.totalorder %s32, %s33
      %p42 = scmp.eq.s32.totalorder %s15, 0
      %p43 = por %p41, %p42
      %p44 = scmp.ne.s32.totalorder %s32, %s33
      %p45 = scmp.eq.s32.totalorder %s16, 1
      %p46 = por %p44, %p45
      %p48 = scmp.ne.s32.totalorder %s33, %s47
      %p49 = scmp.eq.s32.totalorder %s16, 0
      %p50 = por %p48, %p49
      %s51 = ssub.s32 %s17, %s29
      %s52 = ssub.s32 %s18, %s25
      %s53 = sor.u32 %s51, %s52
      %p54 = scmp.eq.s32.totalorder %s53, 0
      %s56 = sadd.s32 %s55, 1
      %s57 = scalar_select %p54, %s55, %s56
      %p60 = pneg %p54
      %p61 = scmp.eq.s32.totalorder %s10, 1
      %p62 = por %p60, %p61
      %p63 = scmp.ne.s32.totalorder %s55, %s58
      %p64 = scmp.eq.s32.totalorder %s10, 0
      %p65 = por %p63, %p64
      %p66 = scmp.ne.s32.totalorder %s55, %s58
      %p67 = scmp.eq.s32.totalorder %s15, 1
      %p68 = por %p66, %p67
      %p69 = scmp.ne.s32.totalorder %s58, %s59
      %p70 = scmp.eq.s32.totalorder %s15, 0
      %p71 = por %p69, %p70
      %p72 = scmp.ne.s32.totalorder %s58, %s59
      %p73 = scmp.eq.s32.totalorder %s16, 1
      %p74 = por %p72, %p73
      %p76 = scmp.ne.s32.totalorder %s59, %s75
      %p77 = scmp.eq.s32.totalorder %s16, 0
      %p78 = por %p76, %p77
      %s79 = ssub.s32 3, %s17
      %s80 = ssub.s32 3, %s29
      %s81 = ssub.s32 %s79, %s80
      %s82 = ssub.s32 %s18, %s25
      %s83 = sor.u32 %s81, %s82
      %p84 = scmp.eq.s32.totalorder %s83, 0
      %s86 = sadd.s32 %s85, 1
      %s87 = scalar_select %p84, %s85, %s86
      %p90 = pneg %p84
      %p91 = scmp.eq.s32.totalorder %s10, 1
      %p92 = por %p90, %p91
      %p93 = scmp.ne.s32.totalorder %s85, %s88
      %p94 = scmp.eq.s32.totalorder %s10, 0
      %p95 = por %p93, %p94
      %p96 = scmp.ne.s32.totalorder %s85, %s88
      %p97 = scmp.eq.s32.totalorder %s15, 1
      %p98 = por %p96, %p97
      %p99 = scmp.ne.s32.totalorder %s88, %s89
      %p100 = scmp.eq.s32.totalorder %s15, 0
      %p101 = por %p99, %p100
      %p102 = scmp.ne.s32.totalorder %s88, %s89
      %p103 = scmp.eq.s32.totalorder %s16, 1
      %p104 = por %p102, %p103
      %p106 = scmp.ne.s32.totalorder %s89, %s105
      %p107 = scmp.eq.s32.totalorder %s16, 0
      %p108 = por %p106, %p107
      %s109 = ssub.s32 %s17, %s29
      %s110 = ssub.s32 %s18, %s25
      %s111 = sor.u32 %s109, %s110
      %p112 = scmp.eq.s32.totalorder %s111, 0
      %s114 = sadd.s32 %s113, 1
      %s115 = scalar_select %p112, %s113, %s114
      %p118 = pneg %p112
      %p119 = scmp.eq.s32.totalorder %s10, 1
      %p120 = por %p118, %p119
      %p121 = scmp.ne.s32.totalorder %s113, %s116
      %p122 = scmp.eq.s32.totalorder %s10, 0
      %p123 = por %p121, %p122
      %p124 = scmp.ne.s32.totalorder %s113, %s116
      %p125 = scmp.eq.s32.totalorder %s15, 1
      %p126 = por %p124, %p125
      %p127 = scmp.ne.s32.totalorder %s116, %s117
      %p128 = scmp.eq.s32.totalorder %s15, 0
      %p129 = por %p127, %p128
      %p130 = scmp.ne.s32.totalorder %s116, %s117
      %p131 = scmp.eq.s32.totalorder %s16, 1
      %p132 = por %p130, %p131
      %p134 = scmp.ne.s32.totalorder %s117, %s133
      %p135 = scmp.eq.s32.totalorder %s16, 0
      %p136 = por %p134, %p135
      %p137 = scmp.le.s32.totalorder 1, %s10
      %p138 = scmp.lt.s32.totalorder %s10, 3
      %p139 = pnand %p137, %p138
      %p140 = pneg %p139
      // Predicated region
      $region9: #{mixup_in_distance.1} parent=5 // pred_check
        _
      $region10: #{mixup_in_distance.1} parent=5 // pred_check_branch
        %142 = sbr.rel (%p139) target = $region12
      $region11: #{mixup_in_distance.1} parent=5 // pred_region
        %s143 = ssub.s32 %s10, 1
        // Predicated region
        $region13: #{mixup_in_distance.1} parent=11 // pred_check
          %p144 = pneg %p43
        $region14: #{mixup_in_distance.1} parent=11 // pred_check_branch
          %146 = sbr.rel (%p144) target = $region16
        $region15: #{mixup_in_distance.1} parent=11 // pred_region
          %s148 = ssub.s32 16, 16
          %149 = vsyncadd [#allocation3], %s148
          %s151 = sshll.u32 %s0, 4
          %s152 = int_to_ptr.vmem [resolvable:$true] %s151
          %154 = dma.vmem_to_smem %s152, 16, [#allocation2], [#allocation3]
        $region16: #{mixup_in_distance.1} parent=11 // pred_fallthru
          _
      $region12: #{mixup_in_distance.1} parent=5 // pred_fallthru
        _
      %p155 = scmp.lt.s32.totalorder %s10, 2
      // Predicated region
      $region17: #{mixup_in_distance.1} parent=5 // pred_check
        %p156 = pneg %p155
      $region18: #{mixup_in_distance.1} parent=5 // pred_check_branch
        %158 = sbr.rel (%p156) target = $region20
      $region19: #{mixup_in_distance.1} parent=5 // pred_region
        // Predicated region
        $region21: #{mixup_in_distance.1} parent=19 // pred_check
          %p159 = pneg %p65
        $region22: #{mixup_in_distance.1} parent=19 // pred_check_branch
          %161 = sbr.rel (%p159) target = $region24
        $region23: #{mixup_in_distance.1} parent=19 // pred_region
          %s162 = smul.u32 4, %s18
          %p163 = scmp.lt.s32.totalorder %s17, 3
          %s164 = scalar_select %p163, %s17, 3
          %p165 = scmp.lt.s32.totalorder %s162, 3
          %s166 = scalar_select %p165, %s162, 3
          %s167 = smul.addr %s164, 4
          %s168 = sadd.s32 %s166, %s167
          %s169 = smul.addr %s168, 8
          %s170 = scalar_lea.vmem %s1, %s169
          %s171 = smul.u32 4, %s18
        $region24: #{mixup_in_distance.1} parent=19 // pred_fallthru
          _
        // Predicated region
        $region25: #{mixup_in_distance.1} parent=19 // pred_check
          %p172 = pneg %p95
        $region26: #{mixup_in_distance.1} parent=19 // pred_check_branch
          %174 = sbr.rel (%p172) target = $region28
        $region27: #{mixup_in_distance.1} parent=19 // pred_region
          %s175 = ssub.s32 3, %s17
          %s176 = smul.u32 4, %s18
          %p177 = scmp.lt.s32.totalorder %s175, 3
          %s178 = scalar_select %p177, %s175, 3
          %p179 = scmp.lt.s32.totalorder %s176, 3
          %s180 = scalar_select %p179, %s176, 3
          %s181 = smul.addr %s178, 4
          %s182 = sadd.s32 %s180, %s181
          %s183 = smul.addr %s182, 8
          %s184 = scalar_lea.vmem %s2, %s183
          %s185 = ssub.s32 3, %s17
          %s186 = smul.u32 4, %s18
        $region28: #{mixup_in_distance.1} parent=19 // pred_fallthru
          _
      $region20: #{mixup_in_distance.1} parent=5 // pred_fallthru
        _
      %p187 = scmp.le.s32.totalorder 1, %s10
      %p188 = scmp.lt.s32.totalorder %s10, 3
      %p189 = pnand %p187, %p188
      %p190 = pneg %p189
      // Predicated region
      $region29: #{mixup_in_distance.1} parent=5 // pred_check
        _
      $region30: #{mixup_in_distance.1} parent=5 // pred_check_branch
        %192 = sbr.rel (%p189) target = $region32
      $region31: #{mixup_in_distance.1} parent=5 // pred_region
        %s193 = ssub.s32 %s10, 1
        // Predicated region
        $region33: #{mixup_in_distance.1} parent=31 // pred_check
          %p194 = pneg %p43
        $region34: #{mixup_in_distance.1} parent=31 // pred_check_branch
          %196 = sbr.rel (%p194) target = $region36
        $region35: #{mixup_in_distance.1} parent=31 // pred_region
          %197 = dma.done [#allocation3], 16
        $region36: #{mixup_in_distance.1} parent=31 // pred_fallthru
          _
        %198 = sfence
        %p199 = pneg %p43
        %p200 = pneg %p40
        %s201 = smul.u32 4, %s20
        %p202 = scmp.lt.s32.totalorder %s19, 3
        %s203 = scalar_select %p202, %s19, 3
        %p204 = scmp.lt.s32.totalorder %s201, 3
        %s205 = scalar_select %p204, %s201, 3
        %s206 = smul.addr %s203, 4
        %s207 = sadd.s32 %s205, %s206
        %s208 = smul.addr %s207, 8
        %s209 = scalar_lea.vmem %s1, %s208
        %p210 = pneg %p71
        %p211 = pneg %p68
        %s212 = ssub.s32 3, %s19
        %s213 = smul.u32 4, %s20
        %p214 = scmp.lt.s32.totalorder %s212, 3
        %s215 = scalar_select %p214, %s212, 3
        %p216 = scmp.lt.s32.totalorder %s213, 3
        %s217 = scalar_select %p216, %s213, 3
        %s218 = smul.addr %s215, 4
        %s219 = sadd.s32 %s217, %s218
        %s220 = smul.addr %s219, 8
        %s221 = scalar_lea.vmem %s2, %s220
        %p222 = pneg %p101
        %p223 = pneg %p98
        %p224 = pneg %p129
        %p225 = pneg %p126
        %s226 = smul.u32 4, %s20
        %p227 = scmp.lt.s32.totalorder %s19, 1
        %s228 = scalar_select %p227, %s19, 1
        %p229 = scmp.lt.s32.totalorder %s226, 3
        %s230 = scalar_select %p229, %s226, 3
        %s231 = smul.addr %s228, 4
        %s232 = sadd.s32 %s230, %s231
        %s233 = smul.addr %s232, 8
        %s234 = scalar_lea.vmem %s3, %s233
        %s235 = smul.u32 4, %s20
        %p236 = scmp.lt.s32.totalorder %s19, 3
        %s237 = scalar_select %p236, %s19, 3
        %p238 = scmp.lt.s32.totalorder %s235, 3
        %s239 = scalar_select %p238, %s235, 3
        %s240 = smul.addr %s237, 4
        %s241 = sadd.s32 %s239, %s240
        %s242 = smul.addr %s241, 8
        %s243 = scalar_lea.vmem %s1, %s242
        %s244 = smul.u32 4, %s20
        %s245 = ssub.s32 3, %s19
        %s246 = smul.u32 4, %s20
        %p247 = scmp.lt.s32.totalorder %s245, 3
        %s248 = scalar_select %p247, %s245, 3
        %p249 = scmp.lt.s32.totalorder %s246, 3
        %s250 = scalar_select %p249, %s246, 3
        %s251 = smul.addr %s248, 4
        %s252 = sadd.s32 %s250, %s251
        %s253 = smul.addr %s252, 8
        %s254 = scalar_lea.vmem %s2, %s253
        %s255 = ssub.s32 3, %s19
        %s256 = smul.u32 4, %s20
        %s257 = smul.u32 4, %s20
        %p258 = scmp.lt.s32.totalorder %s19, 1
        %s259 = scalar_select %p258, %s19, 1
        %p260 = scmp.lt.s32.totalorder %s257, 3
        %s261 = scalar_select %p260, %s257, 3
        %s262 = smul.addr %s259, 4
        %s263 = sadd.s32 %s261, %s262
        %s264 = smul.addr %s263, 8
        %s265 = scalar_lea.vmem %s3, %s264
        %s266 = smul.u32 4, %s20
        %s267 = sld [smem:[#allocation2 + %s19]]
        %v268 = vld [vmem:[%s243] sm:$0xff]
        %v269 = vld [vmem:[%s243 + $0x8] sm:$0xff]
        %v270 = vld [vmem:[%s243 + $0x10] sm:$0xff]
        %v271 = vld [vmem:[%s243 + $0x18] sm:$0xff]
        %v272 = vstv %s267
        %v273 = vmul.f32 %v272, %v268
        %v274 = vmul.f32 %v272, %v269
        %v275 = vmul.f32 %v272, %v270
        %v276 = vmul.f32 %v272, %v271
        %s277 = ssub.f32 1.0, %s267
        %v278 = vld [vmem:[%s254] sm:$0xff]
        %v279 = vld [vmem:[%s254 + $0x8] sm:$0xff]
        %v280 = vld [vmem:[%s254 + $0x10] sm:$0xff]
        %v281 = vld [vmem:[%s254 + $0x18] sm:$0xff]
        %v282 = vstv %s277
        %v283 = vmul.f32 %v282, %v278
        %v284 = vmul.f32 %v282, %v279
        %v285 = vmul.f32 %v282, %v280
        %v286 = vmul.f32 %v282, %v281
        %v287 = vadd.f32 %v273, %v283
        %v288 = vadd.f32 %v274, %v284
        %v289 = vadd.f32 %v275, %v285
        %v290 = vadd.f32 %v276, %v286
        %291 = vst [vmem:[%s265] sm:$0xff] %v287
        %292 = vst [vmem:[%s265 + $0x8] sm:$0xff] %v288
        %293 = vst [vmem:[%s265 + $0x10] sm:$0xff] %v289
        %294 = vst [vmem:[%s265 + $0x18] sm:$0xff] %v290
        %s295 = smul.u32 4, %s20
        %p296 = scmp.lt.s32.totalorder %s19, 1
        %s297 = scalar_select %p296, %s19, 1
        %p298 = scmp.lt.s32.totalorder %s295, 3
        %s299 = scalar_select %p298, %s295, 3
        %s300 = smul.addr %s297, 4
        %s301 = sadd.s32 %s299, %s300
        %s302 = smul.addr %s301, 8
        %s303 = scalar_lea.vmem %s3, %s302
        // Predicated region
        $region37: #{mixup_in_distance.1} parent=31 // pred_check
          %p304 = pneg %p126
        $region38: #{mixup_in_distance.1} parent=31 // pred_check_branch
          %306 = sbr.rel (%p304) target = $region40
        $region39: #{mixup_in_distance.1} parent=31 // pred_region
          %s307 = smul.u32 4, %s20
        $region40: #{mixup_in_distance.1} parent=31 // pred_fallthru
          _
      $region32: #{mixup_in_distance.1} parent=5 // pred_fallthru
        _
      %p308 = scmp.le.s32.totalorder 2, %s10
      // Predicated region
      $region41: #{mixup_in_distance.1} parent=5 // pred_check
        %p309 = pneg %p308
      $region42: #{mixup_in_distance.1} parent=5 // pred_check_branch
        %311 = sbr.rel (%p309) target = $region44
      $region43: #{mixup_in_distance.1} parent=5 // pred_region
        %s312 = ssub.s32 %s10, 2
        // Predicated region
        $region45: #{mixup_in_distance.1} parent=43 // pred_check
          %p313 = pneg %p132
        $region46: #{mixup_in_distance.1} parent=43 // pred_check_branch
          %315 = sbr.rel (%p313) target = $region48
        $region47: #{mixup_in_distance.1} parent=43 // pred_region
          %s316 = smul.u32 4, %s22
          %p317 = scmp.lt.s32.totalorder %s21, 1
          %s318 = scalar_select %p317, %s21, 1
          %p319 = scmp.lt.s32.totalorder %s316, 3
          %s320 = scalar_select %p319, %s316, 3
          %s321 = smul.addr %s318, 4
          %s322 = sadd.s32 %s320, %s321
          %s323 = smul.addr %s322, 8
          %s324 = scalar_lea.vmem %s3, %s323
        $region48: #{mixup_in_distance.1} parent=43 // pred_fallthru
          _
      $region44: #{mixup_in_distance.1} parent=5 // pred_fallthru
        _
    $region6: #{mixup_in_distance.1} parent=1 // loop_footer
      %s14 = sadd.s32 1, %s10
    $region7: #{mixup_in_distance.1} parent=1 // loop_footer_branch
      %9 = sbr.rel target = $region3
    $region8: #{mixup_in_distance.1} parent=1 // loop_exit
      _
    %325 = vsyncpa [#allocation3], 1
    %s326 = scalar_lea.sflag [#allocation3], 1
    %327 = vsyncpa %s326, 1

</llo_original>
